<compile_context>
chip_gen: v7x
topology: tpu7x:2x2x1
jax: 0.10.0
libtpu: 0.0.40
codegen_flags: <defaults>
</compile_context>

<pallas_src>
import functools
import math

import numpy as np
import jax
import jax.numpy as jnp
from jax.experimental import pallas as pl
from jax.experimental.pallas import tpu as pltpu


def _layout(B, S, E, H):
    """Row layout of the packed constant slab. Every section starts on an
    8-row (sublane-tile) boundary so in-kernel windows are tile-aligned."""
    BS, HBS, E3 = B * S, H * B * S, 3 * E
    up8 = lambda v: ((v + 7) // 8) * 8
    sections = [
        ("sum", HBS),      # sum_mask   (HBS, HBS): per-(batch,head) denominator broadcast
        ("head", HBS),     # head_mask  (HBS, E)  : feature columns belonging to each head
        ("batch", BS),     # batch_mask (BS, HBS) : zero cross-batch attention probs
        ("sel_k", E3),     # sel_k      (3E, E)   : extract K from qkv, lane-aligned, via MXU
        ("sel_v", E3),     # sel_v      (3E, E)   : extract V from qkv, lane-aligned, via MXU
        ("w_qkv", E),      # w_qkv      (E, 3E)   : [wq*scale | wk | wv]
        ("w_op", E),       # w_op       (E, E)    : wo @ wp (out_proj ∘ projection)
        ("b_qkv", 1),      # b_qkv      (1, 3E)
        ("b_op", 1),       # b_op       (1, E)
        ("gamma", 1),      # LayerNorm gamma (1, E)
        ("beta", 1),       # LayerNorm beta  (1, E)
    ]
    off, cur = {}, 0
    for name, nrows in sections:
        off[name] = cur
        cur = up8(cur + nrows)
    rows = cur
    ncol = ((max(HBS, E3, 128) + 127) // 128) * 128
    return off, rows, ncol


def gat_kernel(x_ref, c_ref, o_ref, *, B, S, E, H, off):
    BS, HBS, E3 = B * S, H * B * S, 3 * E
    f32 = jnp.float32
    x = x_ref[...]                                                   # (BS, E)

    # --- unpack the resident constant slab (static, tile-aligned windows) ---
    sum_mask   = c_ref[off["sum"]:off["sum"] + HBS, :HBS]            # (HBS, HBS)
    head_mask  = c_ref[off["head"]:off["head"] + HBS, :E]            # (HBS, E)
    batch_mask = c_ref[off["batch"]:off["batch"] + BS, :HBS]         # (BS, HBS)
    sel_k      = c_ref[off["sel_k"]:off["sel_k"] + E3, :E]           # (3E, E)
    sel_v      = c_ref[off["sel_v"]:off["sel_v"] + E3, :E]           # (3E, E)
    w_qkv      = c_ref[off["w_qkv"]:off["w_qkv"] + E, :E3]           # (E, 3E)
    w_op       = c_ref[off["w_op"]:off["w_op"] + E, :E]              # (E, E)
    b_qkv      = c_ref[off["b_qkv"]:off["b_qkv"] + 1, :E3]           # (1, 3E)
    b_op       = c_ref[off["b_op"]:off["b_op"] + 1, :E]              # (1, E)
    gamma      = c_ref[off["gamma"]:off["gamma"] + 1, :E]            # (1, E)
    beta       = c_ref[off["beta"]:off["beta"] + 1, :E]              # (1, E)

    # --- fused, pre-scaled QKV in-projection: one (BS,E)@(E,3E) MXU pass ----
    qkv = jnp.dot(x, w_qkv, preferred_element_type=f32) + b_qkv      # (BS, 3E)

    # q is a lane-aligned prefix view; k/v are re-aligned to lane 0 through
    # the otherwise-idle MXU with precomputed selection constants (no
    # lane-shift slices / relayouts on the VPU/XLU).
    q = qkv[:, :E]                                                   # (BS, E)
    k = jnp.dot(qkv, sel_k, preferred_element_type=f32)              # (BS, E)
    v = jnp.dot(qkv, sel_v, preferred_element_type=f32)              # (BS, E)

    # --- all (batch, head) pairs side by side via block-diagonal masking ----
    k_blocks = jnp.concatenate([k] * H, axis=0) * head_mask          # (HBS, E)
    v_blocks = jnp.concatenate([v] * H, axis=0) * head_mask          # (HBS, E)

    # scores: s[i, h*BS + j] = <q_h[i], k_h[j]>  (1/sqrt(hd) folded into w_qkv)
    s = jax.lax.dot_general(q, k_blocks, (((1,), (1,)), ((), ())),
                            preferred_element_type=f32)              # (BS, HBS)

    # Exact softmax per (row, head): the row-global max subtraction cancels in
    # numerator/denominator, and cross-batch entries are zeroed after exp.
    s = s - jnp.max(s, axis=-1, keepdims=True)
    p = jnp.exp(s) * batch_mask

    # Per-(batch,head) denominators broadcast back over each head's BS columns
    # with one block-diagonal matmul (keeps the reduction 2-D, on the MXU).
    denom = jnp.dot(p, sum_mask, preferred_element_type=f32)         # (BS, HBS)
    p = p * pl.reciprocal(denom, approx=False)

    # Context for all heads at once: (BS, HBS) @ (HBS, E) -> (BS, E).
    ctx = jnp.dot(p, v_blocks, preferred_element_type=f32)           # (BS, E)

    # --- fused out_proj ∘ projection, residual, LayerNorm -------------------
    y = jnp.dot(ctx, w_op, preferred_element_type=f32) + b_op + x
    mean = jnp.mean(y, axis=-1, keepdims=True)
    var = jnp.mean((y - mean) ** 2, axis=-1, keepdims=True)
    out = (y - mean) * jax.lax.rsqrt(var + 1e-5) * gamma + beta

    # nn.Dropout(0.1) is identity in eval mode.
    # TODO(synk): training-mode dropout (output dropout + attention-prob
    # dropout inside nn.MultiheadAttention) not implemented; the wo@wp fusion
    # would also be invalid with dropout between out_proj and projection.
    o_ref[...] = out.astype(o_ref.dtype)


def graph_attention_network(x, params, num_heads):
    B, S, E = x.shape
    H = num_heads
    out_features = params["wp"].shape[1]
    assert out_features == E, "residual in the reference forward requires out == in"
    assert E % H == 0, "embed dim must be divisible by num_heads"
    hd = E // H
    BS, HBS, E3 = B * S, H * B * S, 3 * E
    off, rows, ncol = _layout(B, S, E, H)

    # ---- one-time wrapper-side fusion / constant folding (plain XLA) -------
    scale = 1.0 / math.sqrt(hd)
    w_qkv = jnp.concatenate([params["wq"] * scale, params["wk"], params["wv"]], axis=1)
    b_qkv = jnp.concatenate([params["bq"] * scale, params["bk"], params["bv"]], axis=1)
    w_op = params["wo"] @ params["wp"]                    # out_proj ∘ projection
    b_op = params["bo"] @ params["wp"] + params["bp"]

    # Compile-time constant masks / selection matrices (built with numpy).
    r_idx = np.arange(HBS)
    e_idx = np.arange(E)
    i_idx = np.arange(BS)
    head_mask = (e_idx[None, :] // hd == r_idx[:, None] // BS).astype(np.float32)
    sum_mask = (r_idx[:, None] // BS == r_idx[None, :] // BS).astype(np.float32)
    batch_mask = (i_idx[:, None] // S == (r_idx[None, :] % BS) // S).astype(np.float32)
    sel_k = np.zeros((E3, E), np.float32)
    sel_k[E + e_idx, e_idx] = 1.0
    sel_v = np.zeros((E3, E), np.float32)
    sel_v[2 * E + e_idx, e_idx] = 1.0

    # Pack everything into ONE resident constant slab -> 2 DMA'd inputs total.
    consts = jnp.zeros((rows, ncol), jnp.float32)
    consts = consts.at[off["sum"]:off["sum"] + HBS, :HBS].set(jnp.asarray(sum_mask))
    consts = consts.at[off["head"]:off["head"] + HBS, :E].set(jnp.asarray(head_mask))
    consts = consts.at[off["batch"]:off["batch"] + BS, :HBS].set(jnp.asarray(batch_mask))
    consts = consts.at[off["sel_k"]:off["sel_k"] + E3, :E].set(jnp.asarray(sel_k))
    consts = consts.at[off["sel_v"]:off["sel_v"] + E3, :E].set(jnp.asarray(sel_v))
    consts = consts.at[off["w_qkv"]:off["w_qkv"] + E, :E3].set(w_qkv)
    consts = consts.at[off["w_op"]:off["w_op"] + E, :E].set(w_op)
    consts = consts.at[off["b_qkv"]:off["b_qkv"] + 1, :E3].set(b_qkv)
    consts = consts.at[off["b_op"]:off["b_op"] + 1, :E].set(b_op)
    consts = consts.at[off["gamma"]:off["gamma"] + 1, :E].set(params["gamma"])
    consts = consts.at[off["beta"]:off["beta"] + 1, :E].set(params["beta"])

    # Stack batch onto sublanes: (B, S, E) -> (B*S, E) (contiguous, free).
    x2 = x.reshape(BS, E)

    kernel = functools.partial(gat_kernel, B=B, S=S, E=E, H=H, off=off)

    out2 = pl.pallas_call(
        kernel,
        out_shape=jax.ShapeDtypeStruct((BS, E), x.dtype),
        grid_spec=pltpu.PrefetchScalarGridSpec(
            num_scalar_prefetch=0,
            grid=(1,),                          # single step: whole problem in one shot
            in_specs=[
                pl.BlockSpec((BS, E), lambda step: (0, 0)),
                pl.BlockSpec((rows, ncol), lambda step: (0, 0)),
            ],
            out_specs=pl.BlockSpec((BS, E), lambda step: (0, 0)),
        ),
        compiler_params=pltpu.CompilerParams(
            dimension_semantics=("arbitrary",),
            vmem_limit_bytes=32 * 1024 * 1024,
        ),
    )(x2, consts)
    return out2.reshape(B, S, E)


def reference_forward(x, params, num_heads):
    """Pure-JAX reference mirroring the PyTorch forward (eval mode), unfused."""
    B, S, E = x.shape
    hd = E // num_heads
    q = x @ params["wq"] + params["bq"][0]
    k = x @ params["wk"] + params["bk"][0]
    v = x @ params["wv"] + params["bv"][0]
    q = q.reshape(B, S, num_heads, hd).transpose(0, 2, 1, 3)
    k = k.reshape(B, S, num_heads, hd).transpose(0, 2, 1, 3)
    v = v.reshape(B, S, num_heads, hd).transpose(0, 2, 1, 3)
    s = jnp.einsum("bhqd,bhkd->bhqk", q, k) / math.sqrt(hd)
    p = jax.nn.softmax(s, axis=-1)
    ctx = jnp.einsum("bhqk,bhkd->bhqd", p, v).transpose(0, 2, 1, 3).reshape(B, S, E)
    attended = ctx @ params["wo"] + params["bo"][0]
    proj = attended @ params["wp"] + params["bp"][0]
    y = proj + x
    mean = jnp.mean(y, axis=-1, keepdims=True)
    var = jnp.mean((y - mean) ** 2, axis=-1, keepdims=True)
    return (y - mean) / jnp.sqrt(var + 1e-5) * params["gamma"][0] + params["beta"][0]


if __name__ == "__main__":
    B, S, E = 2, 8, 32          # batch, nodes (sequence), in_features == out_features
    num_heads = 8               # module default

    key = jax.random.PRNGKey(0)
    ks = jax.random.split(key, 12)

    def w(k, shape, scale=0.05):
        return jax.random.normal(k, shape, dtype=jnp.float32) * scale

    params = {
        "wq": w(ks[0], (E, E)), "wk": w(ks[1], (E, E)), "wv": w(ks[2], (E, E)),
        "bq": w(ks[3], (1, E), 0.01), "bk": w(ks[4], (1, E), 0.01), "bv": w(ks[5], (1, E), 0.01),
        "wo": w(ks[6], (E, E)), "bo": w(ks[7], (1, E), 0.01),
        "wp": w(ks[8], (E, E)), "bp": w(ks[9], (1, E), 0.01),
        "gamma": jnp.ones((1, E), jnp.float32),
        "beta": jnp.zeros((1, E), jnp.float32),
    }

    # Inputs/weights kept f32 to preserve the 1e-4 parity check; cast to bf16
    # (keeping f32 accumulation) only if/when E and S grow.
    x = jax.random.normal(ks[10], (B, S, E), dtype=jnp.float32)

    out = graph_attention_network(x, params, num_heads)
    out = jax.block_until_ready(out)

    ref = reference_forward(x, params, num_heads)
    assert out.shape == (B, S, E)
    assert jnp.allclose(out, ref, atol=1e-4, rtol=1e-4), "mismatch vs JAX reference"

    print("KERNEL_OK")
</pallas_src>

<mosaic_0001>
module attributes {stable_mosaic.version = 11 : i64} {
  func.func @gat_kernel(%arg0: i32, %arg1: memref<16x32xf32, #tpu.memory_space<vmem>>, %arg2: memref<560x128xf32, #tpu.memory_space<vmem>>, %arg3: memref<16x32xf32, #tpu.memory_space<vmem>>) attributes {dimension_semantics = [#tpu.dimension_semantics<arbitrary>], iteration_bounds = array<i64: 1>, scalar_prefetch = 0 : i64, scratch_operands = 0 : i64, tpu.core_type = #tpu.core_type<tc>, window_params = [{pipeline_mode = #tpu.pipeline_mode<synchronous>, transform_indices = @transform_0, window_bounds = array<i64: 16, 32>}, {pipeline_mode = #tpu.pipeline_mode<synchronous>, transform_indices = @transform_1, window_bounds = array<i64: 560, 128>}, {pipeline_mode = #tpu.pipeline_mode<synchronous>, transform_indices = @transform_2, window_bounds = array<i64: 16, 32>}]} {
    %c0 = arith.constant 0 : index
    %c0_0 = arith.constant 0 : index
    %0 = vector.load %arg1[%c0, %c0_0] : memref<16x32xf32, #tpu.memory_space<vmem>>, vector<16x32xf32>
    %c0_1 = arith.constant 0 : index
    %c0_2 = arith.constant 0 : index
    %1 = vector.load %arg2[%c0_1, %c0_2] : memref<560x128xf32, #tpu.memory_space<vmem>>, vector<128x128xf32>
    %c128 = arith.constant 128 : index
    %c0_3 = arith.constant 0 : index
    %2 = vector.load %arg2[%c128, %c0_3] : memref<560x128xf32, #tpu.memory_space<vmem>>, vector<128x32xf32>
    %c256 = arith.constant 256 : index
    %c0_4 = arith.constant 0 : index
    %3 = vector.load %arg2[%c256, %c0_4] : memref<560x128xf32, #tpu.memory_space<vmem>>, vector<16x128xf32>
    %c272 = arith.constant 272 : index
    %c0_5 = arith.constant 0 : index
    %4 = vector.load %arg2[%c272, %c0_5] : memref<560x128xf32, #tpu.memory_space<vmem>>, vector<96x32xf32>
    %c368 = arith.constant 368 : index
    %c0_6 = arith.constant 0 : index
    %5 = vector.load %arg2[%c368, %c0_6] : memref<560x128xf32, #tpu.memory_space<vmem>>, vector<96x32xf32>
    %c464 = arith.constant 464 : index
    %c0_7 = arith.constant 0 : index
    %6 = vector.load %arg2[%c464, %c0_7] : memref<560x128xf32, #tpu.memory_space<vmem>>, vector<32x96xf32>
    %c496 = arith.constant 496 : index
    %c0_8 = arith.constant 0 : index
    %7 = vector.load %arg2[%c496, %c0_8] : memref<560x128xf32, #tpu.memory_space<vmem>>, vector<32x32xf32>
    %c528 = arith.constant 528 : index
    %c0_9 = arith.constant 0 : index
    %8 = vector.load %arg2[%c528, %c0_9] : memref<560x128xf32, #tpu.memory_space<vmem>>, vector<1x96xf32>
    %c536 = arith.constant 536 : index
    %c0_10 = arith.constant 0 : index
    %9 = vector.load %arg2[%c536, %c0_10] : memref<560x128xf32, #tpu.memory_space<vmem>>, vector<1x32xf32>
    %c544 = arith.constant 544 : index
    %c0_11 = arith.constant 0 : index
    %10 = vector.load %arg2[%c544, %c0_11] : memref<560x128xf32, #tpu.memory_space<vmem>>, vector<1x32xf32>
    %c552 = arith.constant 552 : index
    %c0_12 = arith.constant 0 : index
    %11 = vector.load %arg2[%c552, %c0_12] : memref<560x128xf32, #tpu.memory_space<vmem>>, vector<1x32xf32>
    %cst = arith.constant dense<0.000000e+00> : vector<16x96xf32>
    %12 = tpu.matmul %0, %6, %cst {dimension_numbers = #tpu.dot_dimension_numbers<[1], [0], [0], [1], [0, 0, 1, 1], [], []>} : vector<16x32xf32>, vector<32x96xf32>, vector<16x96xf32> -> vector<16x96xf32>
    %13 = vector.broadcast %8 : vector<1x96xf32> to vector<16x96xf32>
    %14 = arith.addf %12, %13 : vector<16x96xf32>
    %15 = vector.extract_strided_slice %14 {offsets = [0, 0], sizes = [16, 32], strides = [1, 1]} : vector<16x96xf32> to vector<16x32xf32>
    %cst_13 = arith.constant dense<0.000000e+00> : vector<16x32xf32>
    %16 = tpu.matmul %14, %4, %cst_13 {dimension_numbers = #tpu.dot_dimension_numbers<[1], [0], [0], [1], [0, 0, 1, 1], [], []>} : vector<16x96xf32>, vector<96x32xf32>, vector<16x32xf32> -> vector<16x32xf32>
    %cst_14 = arith.constant dense<0.000000e+00> : vector<16x32xf32>
    %17 = tpu.matmul %14, %5, %cst_14 {dimension_numbers = #tpu.dot_dimension_numbers<[1], [0], [0], [1], [0, 0, 1, 1], [], []>} : vector<16x96xf32>, vector<96x32xf32>, vector<16x32xf32> -> vector<16x32xf32>
    %18 = tpu.concatenate %16, %16, %16, %16, %16, %16, %16, %16 in 0 : vector<16x32xf32>, vector<16x32xf32>, vector<16x32xf32>, vector<16x32xf32>, vector<16x32xf32>, vector<16x32xf32>, vector<16x32xf32>, vector<16x32xf32> -> vector<128x32xf32>
    %19 = arith.mulf %18, %2 : vector<128x32xf32>
    %20 = tpu.concatenate %17, %17, %17, %17, %17, %17, %17, %17 in 0 : vector<16x32xf32>, vector<16x32xf32>, vector<16x32xf32>, vector<16x32xf32>, vector<16x32xf32>, vector<16x32xf32>, vector<16x32xf32>, vector<16x32xf32> -> vector<128x32xf32>
    %21 = arith.mulf %20, %2 : vector<128x32xf32>
    %cst_15 = arith.constant dense<0.000000e+00> : vector<16x128xf32>
    %22 = tpu.matmul %15, %19, %cst_15 {dimension_numbers = #tpu.dot_dimension_numbers<[1], [1], [0], [0], [0, 0, 1, 0], [], []>} : vector<16x32xf32>, vector<128x32xf32>, vector<16x128xf32> -> vector<16x128xf32>
    %cst_16 = arith.constant dense<0xFF800000> : vector<16xf32>
    %23 = vector.multi_reduction <maximumf>, %22, %cst_16 [1] : vector<16x128xf32> to vector<16xf32>
    %24 = vector.shape_cast %23 : vector<16xf32> to vector<16x1xf32>
    %25 = vector.broadcast %24 : vector<16x1xf32> to vector<16x128xf32>
    %26 = arith.subf %22, %25 : vector<16x128xf32>
    %27 = math.exp %26 : vector<16x128xf32>
    %28 = arith.mulf %27, %3 : vector<16x128xf32>
    %cst_17 = arith.constant dense<0.000000e+00> : vector<16x128xf32>
    %29 = tpu.matmul %28, %1, %cst_17 {dimension_numbers = #tpu.dot_dimension_numbers<[1], [0], [0], [1], [0, 0, 1, 1], [], []>} : vector<16x128xf32>, vector<128x128xf32>, vector<16x128xf32> -> vector<16x128xf32>
    %30 = tpu.reciprocal %29 : vector<16x128xf32> -> vector<16x128xf32>
    %31 = arith.mulf %28, %30 : vector<16x128xf32>
    %cst_18 = arith.constant dense<0.000000e+00> : vector<16x32xf32>
    %32 = tpu.matmul %31, %21, %cst_18 {dimension_numbers = #tpu.dot_dimension_numbers<[1], [0], [0], [1], [0, 0, 1, 1], [], []>} : vector<16x128xf32>, vector<128x32xf32>, vector<16x32xf32> -> vector<16x32xf32>
    %cst_19 = arith.constant dense<0.000000e+00> : vector<16x32xf32>
    %33 = tpu.matmul %32, %7, %cst_19 {dimension_numbers = #tpu.dot_dimension_numbers<[1], [0], [0], [1], [0, 0, 1, 1], [], []>} : vector<16x32xf32>, vector<32x32xf32>, vector<16x32xf32> -> vector<16x32xf32>
    %34 = vector.broadcast %9 : vector<1x32xf32> to vector<16x32xf32>
    %35 = arith.addf %33, %34 : vector<16x32xf32>
    %36 = arith.addf %35, %0 : vector<16x32xf32>
    %cst_20 = arith.constant dense<0.000000e+00> : vector<16xf32>
    %37 = vector.multi_reduction <add>, %36, %cst_20 [1] : vector<16x32xf32> to vector<16xf32>
    %38 = vector.shape_cast %37 : vector<16xf32> to vector<16x1xf32>
    %cst_21 = arith.constant 3.200000e+01 : f32
    %39 = vector.broadcast %cst_21 : f32 to vector<16x1xf32>
    %40 = arith.divf %38, %39 : vector<16x1xf32>
    %41 = vector.broadcast %40 : vector<16x1xf32> to vector<16x32xf32>
    %42 = arith.subf %36, %41 : vector<16x32xf32>
    %43 = arith.mulf %42, %42 : vector<16x32xf32>
    %cst_22 = arith.constant dense<0.000000e+00> : vector<16xf32>
    %44 = vector.multi_reduction <add>, %43, %cst_22 [1] : vector<16x32xf32> to vector<16xf32>
    %45 = vector.shape_cast %44 : vector<16xf32> to vector<16x1xf32>
    %cst_23 = arith.constant 3.200000e+01 : f32
    %46 = vector.broadcast %cst_23 : f32 to vector<16x1xf32>
    %47 = arith.divf %45, %46 : vector<16x1xf32>
    %48 = vector.broadcast %40 : vector<16x1xf32> to vector<16x32xf32>
    %49 = arith.subf %36, %48 : vector<16x32xf32>
    %cst_24 = arith.constant 9.99999974E-6 : f32
    %50 = vector.broadcast %cst_24 : f32 to vector<16x1xf32>
    %51 = arith.addf %47, %50 : vector<16x1xf32>
    %52 = math.rsqrt %51 : vector<16x1xf32>
    %53 = vector.broadcast %52 : vector<16x1xf32> to vector<16x32xf32>
    %54 = arith.mulf %49, %53 : vector<16x32xf32>
    %55 = vector.broadcast %10 : vector<1x32xf32> to vector<16x32xf32>
    %56 = arith.mulf %54, %55 : vector<16x32xf32>
    %57 = vector.broadcast %11 : vector<1x32xf32> to vector<16x32xf32>
    %58 = arith.addf %56, %57 : vector<16x32xf32>
    %c0_25 = arith.constant 0 : index
    %c0_26 = arith.constant 0 : index
    %59 = vector.load %arg3[%c0_25, %c0_26] : memref<16x32xf32, #tpu.memory_space<vmem>>, vector<16x32xf32>
    tpu.vector_store %arg3[%c0_25, %c0_26], %58 {strides = array<i32>} : memref<16x32xf32, #tpu.memory_space<vmem>>, vector<16x32xf32>,
    return
  }
  func.func @transform_0(%arg0: i32) -> (i32, i32) {
    %c0_i32 = arith.constant 0 : i32
    %c0_i32_0 = arith.constant 0 : i32
    %c0_i32_1 = arith.constant 0 : i32
    return %c0_i32, %c0_i32_0 : i32, i32
  }
  func.func @transform_1(%arg0: i32) -> (i32, i32) {
    %c0_i32 = arith.constant 0 : i32
    %c0_i32_0 = arith.constant 0 : i32
    %c0_i32_1 = arith.constant 0 : i32
    return %c0_i32, %c0_i32_0 : i32, i32
  }
  func.func @transform_2(%arg0: i32) -> (i32, i32) {
    %c0_i32 = arith.constant 0 : i32
    %c0_i32_0 = arith.constant 0 : i32
    %c0_i32_1 = arith.constant 0 : i32
    return %c0_i32, %c0_i32_0 : i32, i32
  }
}

</mosaic_0001>

<llo_original>
// kernel: tpu_custom_call.1
$region0: #{tpu_custom_call.1}
  #allocation0 [shape = 'u32[]', space=smem, size = 0x4, offset = 0x4, fixed_abs, tag = 'smem constant byte address 0x4 - core index']
  #allocation1 [shape = 'u32[144,128]{1,0:T(1,128)}', space=vmem, size = 0x12000, scoped, tag = 'internal scratch']
  %s0 = inlined_call_operand.hbm [shape: f32[16,32], index: 0, kind: input, shape index: {}]
  %s1 = inlined_call_operand.hbm [shape: f32[560,128], index: 1, kind: input, shape index: {}]
  %s2 = inlined_call_operand.hbm [shape: f32[16,32], index: 2, kind: output, shape index: {}]
  %s3 = sld [smem:[#allocation0]]
  $region26: #{tpu_custom_call.1} parent=0
    _
  %s5 = ssub.s32 1, %s3
  %s6 = scalar_select 0, %s5, %s3
  $region1: #{tpu_custom_call.1} parent=0
    #allocation2 [shape = 'u8[8192]{0}', space=vmem, size = 0x2000, scoped, tag = 'input window, operand 0, single buffered']
    #allocation3 [shape = 's32[1]{0}', space=sflag, size = 0x4, scoped, tag = 'scoped memory for tpu_custom_call.1']
    #allocation4 [shape = 's32[1]{0}', space=sflag, size = 0x4, scoped, tag = 'scoped memory for tpu_custom_call.1']
    #allocation5 [shape = 'u8[286720]{0}', space=vmem, size = 0x46000, scoped, tag = 'input window, operand 1, single buffered']
    #allocation6 [shape = 's32[1]{0}', space=sflag, size = 0x4, scoped, tag = 'scoped memory for tpu_custom_call.1']
    #allocation7 [shape = 'u8[8192]{0}', space=vmem, size = 0x2000, scoped, tag = 'output window, operand 0, single buffered']
    %7 = vsyncpa [#allocation3], 0
    %8 = vsyncpa [#allocation6], 0
    %9 = vsyncpa [#allocation4], 0
    // Predicated region
    $region2: #{tpu_custom_call.1} parent=1 // pred_check
      _
    $region3: #{tpu_custom_call.1} parent=1 // pred_check_branch
      %11 = sbr.rel (0) target = $region5
    $region4: #{tpu_custom_call.1} parent=1 // pred_region
      %s13 = ssub.s32 256, 256
      %14 = vsyncadd [#allocation3], %s13
      %s15 = sshll.u32 [#allocation2], 4
      %s16 = int_to_ptr.vmem [resolvable:$true] %s15
      %21 = dma.hbm_to_vmem [thread:$0]  %s0, 256, %s16, [#allocation3], 128, 128, 8
    $region5: #{tpu_custom_call.1} parent=1 // pred_fallthru
      _
    // Predicated region
    $region6: #{tpu_custom_call.1} parent=1 // pred_check
      _
    $region7: #{tpu_custom_call.1} parent=1 // pred_check_branch
      %23 = sbr.rel (0) target = $region9
    $region8: #{tpu_custom_call.1} parent=1 // pred_region
      %s25 = ssub.s32 8960, 8960
      %26 = vsyncadd [#allocation6], %s25
      %s27 = sshll.u32 [#allocation5], 4
      %s28 = int_to_ptr.vmem [resolvable:$true] %s27
      %33 = dma.hbm_to_vmem [thread:$0]  %s1, 8960, %s28, [#allocation6], 128, 128, 8
    $region9: #{tpu_custom_call.1} parent=1 // pred_fallthru
      _
    // Predicated region
    $region10: #{tpu_custom_call.1} parent=1 // pred_check
      _
    $region11: #{tpu_custom_call.1} parent=1 // pred_check_branch
      %35 = sbr.rel (0) target = $region13
    $region12: #{tpu_custom_call.1} parent=1 // pred_region
      %36 = dma.done [#allocation3], 256
    $region13: #{tpu_custom_call.1} parent=1 // pred_fallthru
      _
    // Predicated region
    $region14: #{tpu_custom_call.1} parent=1 // pred_check
      _
    $region15: #{tpu_custom_call.1} parent=1 // pred_check_branch
      %38 = sbr.rel (0) target = $region17
    $region16: #{tpu_custom_call.1} parent=1 // pred_region
      %39 = dma.done [#allocation6], 8960
    $region17: #{tpu_custom_call.1} parent=1 // pred_fallthru
      _
    %v40 = vld [vmem:[#allocation2] sm:$0xff]
    %v41 = vld [vmem:[#allocation2 + $0x8] sm:$0xff]
    %v42 = vld [vmem:[#allocation5] sm:$0xff]
    %v43 = vld [vmem:[#allocation5 + $0x8] sm:$0xff]
    %v44 = vld [vmem:[#allocation5 + $0x10] sm:$0xff]
    %v45 = vld [vmem:[#allocation5 + $0x18] sm:$0xff]
    %v46 = vld [vmem:[#allocation5 + $0x20] sm:$0xff]
    %v47 = vld [vmem:[#allocation5 + $0x28] sm:$0xff]
    %v48 = vld [vmem:[#allocation5 + $0x30] sm:$0xff]
    %v49 = vld [vmem:[#allocation5 + $0x38] sm:$0xff]
    %v50 = vld [vmem:[#allocation5 + $0x40] sm:$0xff]
    %v51 = vld [vmem:[#allocation5 + $0x48] sm:$0xff]
    %v52 = vld [vmem:[#allocation5 + $0x50] sm:$0xff]
    %v53 = vld [vmem:[#allocation5 + $0x58] sm:$0xff]
    %v54 = vld [vmem:[#allocation5 + $0x60] sm:$0xff]
    %v55 = vld [vmem:[#allocation5 + $0x68] sm:$0xff]
    %v56 = vld [vmem:[#allocation5 + $0x70] sm:$0xff]
    %v57 = vld [vmem:[#allocation5 + $0x78] sm:$0xff]
    %v58 = vld [vmem:[#allocation5 + $0x80] sm:$0xff]
    %v59 = vld [vmem:[#allocation5 + $0x88] sm:$0xff]
    %v60 = vld [vmem:[#allocation5 + $0x90] sm:$0xff]
    %v61 = vld [vmem:[#allocation5 + $0x98] sm:$0xff]
    %v62 = vld [vmem:[#allocation5 + $0xa0] sm:$0xff]
    %v63 = vld [vmem:[#allocation5 + $0xa8] sm:$0xff]
    %v64 = vld [vmem:[#allocation5 + $0xb0] sm:$0xff]
    %v65 = vld [vmem:[#allocation5 + $0xb8] sm:$0xff]
    %v66 = vld [vmem:[#allocation5 + $0xc0] sm:$0xff]
    %v67 = vld [vmem:[#allocation5 + $0xc8] sm:$0xff]
    %v68 = vld [vmem:[#allocation5 + $0xd0] sm:$0xff]
    %v69 = vld [vmem:[#allocation5 + $0xd8] sm:$0xff]
    %v70 = vld [vmem:[#allocation5 + $0xe0] sm:$0xff]
    %v71 = vld [vmem:[#allocation5 + $0xe8] sm:$0xff]
    %v72 = vld [vmem:[#allocation5 + $0xf0] sm:$0xff]
    %v73 = vld [vmem:[#allocation5 + $0xf8] sm:$0xff]
    %v74 = vld [vmem:[#allocation5 + $0x100] sm:$0xff]
    %v75 = vld [vmem:[#allocation5 + $0x108] sm:$0xff]
    %v76 = vld [vmem:[#allocation5 + $0x110] sm:$0xff]
    %v77 = vld [vmem:[#allocation5 + $0x118] sm:$0xff]
    %v78 = vld [vmem:[#allocation5 + $0x120] sm:$0xff]
    %v79 = vld [vmem:[#allocation5 + $0x128] sm:$0xff]
    %v80 = vld [vmem:[#allocation5 + $0x130] sm:$0xff]
    %v81 = vld [vmem:[#allocation5 + $0x138] sm:$0xff]
    %v82 = vld [vmem:[#allocation5 + $0x140] sm:$0xff]
    %v83 = vld [vmem:[#allocation5 + $0x148] sm:$0xff]
    %v84 = vld [vmem:[#allocation5 + $0x150] sm:$0xff]
    %v85 = vld [vmem:[#allocation5 + $0x158] sm:$0xff]
    %v86 = vld [vmem:[#allocation5 + $0x160] sm:$0xff]
    %v87 = vld [vmem:[#allocation5 + $0x168] sm:$0xff]
    %v88 = vld [vmem:[#allocation5 + $0x170] sm:$0xff]
    %v89 = vld [vmem:[#allocation5 + $0x178] sm:$0xff]
    %v90 = vld [vmem:[#allocation5 + $0x180] sm:$0xff]
    %v91 = vld [vmem:[#allocation5 + $0x188] sm:$0xff]
    %v92 = vld [vmem:[#allocation5 + $0x190] sm:$0xff]
    %v93 = vld [vmem:[#allocation5 + $0x198] sm:$0xff]
    %v94 = vld [vmem:[#allocation5 + $0x1a0] sm:$0xff]
    %v95 = vld [vmem:[#allocation5 + $0x1a8] sm:$0xff]
    %v96 = vld [vmem:[#allocation5 + $0x1b0] sm:$0xff]
    %v97 = vld [vmem:[#allocation5 + $0x1b8] sm:$0xff]
    %v98 = vld [vmem:[#allocation5 + $0x1c0] sm:$0xff]
    %v99 = vld [vmem:[#allocation5 + $0x1c8] sm:$0xff]
    %v100 = vld [vmem:[#allocation5 + $0x1d0] sm:$0xff]
    %v101 = vld [vmem:[#allocation5 + $0x1d8] sm:$0xff]
    %v102 = vld [vmem:[#allocation5 + $0x1e0] sm:$0xff]
    %v103 = vld [vmem:[#allocation5 + $0x1e8] sm:$0xff]
    %v104 = vld [vmem:[#allocation5 + $0x1f0] sm:$0xff]
    %v105 = vld [vmem:[#allocation5 + $0x1f8] sm:$0xff]
    %v106 = vld [vmem:[#allocation5 + $0x200] sm:$0xff]
    %v107 = vld [vmem:[#allocation5 + $0x208] sm:$0xff]
    %v108 = vld [vmem:[#allocation5 + $0x210] sm:$0x1]
    %v109 = vld [vmem:[#allocation5 + $0x218] sm:$0x1]
    %v110 = vld [vmem:[#allocation5 + $0x220] sm:$0x1]
    %v111 = vld [vmem:[#allocation5 + $0x228] sm:$0x1]
    %v112 = vlaneseq
    %v113 = vshrl.u32 %v112, 7
    %v114 = vsub.s32 0, %v113
    %v115 = vrot.slane %v108, %v114
    %vm116 = vcmask 261120
    %v118 = vsel %vm116, %v40, 0
    %v121 = vsel %vm116, %v41, 0
    %123 = vmatprep.subr.mxu0 0.0
    %124 = vmatpush1.msra.mxu0 %v100
    %125 = vmatprep.subr.mxu0 0.0
    %126 = vmatpush1.msra.mxu0 %v101
    %127 = vmatprep.subr.mxu0 0.0
    %128 = vmatpush1.msra.mxu0 %v102
    %129 = vmatprep.subr.mxu0 0.0
    %130 = vmatpush1.msra.mxu0 %v103
    %131 = vmatprep.subr.mxu0 0.0
    %132 = vmatpush1.msra.mxu0 0.0
    %133 = vmatprep.subr.mxu0 0.0
    %134 = vmatpush1.msra.mxu0 0.0
    %135 = vmatprep.subr.mxu0 0.0
    %136 = vmatpush1.msra.mxu0 0.0
    %137 = vmatprep.subr.mxu0 0.0
    %138 = vmatpush1.msra.mxu0 0.0
    %139 = vmatprep.subr.mxu0 0.0
    %140 = vmatpush1.msra.mxu0 0.0
    %141 = vmatprep.subr.mxu0 0.0
    %142 = vmatpush1.msra.mxu0 0.0
    %143 = vmatprep.subr.mxu0 0.0
    %144 = vmatpush1.msra.mxu0 0.0
    %145 = vmatprep.subr.mxu0 0.0
    %146 = vmatpush1.msra.mxu0 0.0
    %147 = vmatprep.subr.mxu0 0.0
    %148 = vmatpush1.msra.mxu0 0.0
    %149 = vmatprep.subr.mxu0 0.0
    %150 = vmatpush1.msra.mxu0 0.0
    %151 = vmatprep.subr.mxu0 0.0
    %152 = vmatpush1.msra.mxu0 0.0
    %153 = vmatprep.subr.mxu0 0.0
    %154 = vmatpush1.msra.mxu0 0.0
    %155 = vmatprep.subr.mxu0 0.0
    %156 = vmatpush1.msra.mxu0 0.0
    %157 = vmatprep.subr.mxu0 0.0
    %158 = vmatpush1.msra.mxu0 0.0
    %159 = vmatprep.subr.mxu0 0.0
    %160 = vmatpush1.msra.mxu0 0.0
    %161 = vmatprep.subr.mxu0 0.0
    %162 = vmatpush1.msra.mxu0 0.0
    %163 = vmatprep.subr.mxu0 0.0
    %164 = vmatpush1.msra.mxu0 0.0
    %165 = vmatprep.subr.mxu0 0.0
    %166 = vmatpush1.msra.mxu0 0.0
    %167 = vmatprep.subr.mxu0 0.0
    %168 = vmatpush1.msra.mxu0 0.0
    %169 = vmatprep.subr.mxu0 0.0
    %170 = vmatpush1.msra.mxu0 0.0
    %171 = vmatprep.subr.mxu0 0.0
    %172 = vmatpush1.msra.mxu0 0.0
    %173 = vmatprep.subr.mxu0 0.0
    %174 = vmatpush1.msra.mxu0 0.0
    %175 = vmatprep.subr.mxu0 0.0
    %176 = vmatpush1.msra.mxu0 0.0
    %177 = vmatprep.subr.mxu0 0.0
    %178 = vmatpush1.msra.mxu0 0.0
    %179 = vmatprep.subr.mxu0 0.0
    %180 = vmatpush1.msra.mxu0 0.0
    %181 = vmatprep.subr.mxu0 0.0
    %182 = vmatpush1.msra.mxu0 0.0
    %183 = vmatprep.subr.mxu0 0.0
    %184 = vmatpush1.msra.mxu0 0.0
    %185 = vmatprep.subr.mxu0 0.0
    %186 = vmatpush1.msra.mxu0 0.0
    %187 = vmatprep.mubr.f32.mxu0 0.0
    %188 = vmatmul.mubr.f32.gmra.mrb[0].mxu0 %v118
    %v189 = vpop.f32.mrb[0].mxu0
    %v190 = vadd.f32 %v115, %v189
    %v191 = vpop.f32.mrb[0].mxu0
    %192 = vmatprep.mubr.f32.mxu0 0.0
    %193 = vmatmul.mubr.f32.gmra.mrb[0].mxu0 %v121
    %v194 = vpop.f32.mrb[0].mxu0
    %v195 = vadd.f32 %v115, %v194
    %v196 = vpop.f32.mrb[0].mxu0
    %197 = vdwg.mxu0
    %vm198 = vcmask 785408
    %v200 = vsel %vm198, %v190, 0
    %v203 = vsel %vm198, %v195, 0
    %205 = vmatprep.subr.mxu0 0.0
    %206 = vmatpush1.msra.mxu0 %v76
    %207 = vmatprep.subr.mxu0 0.0
    %208 = vmatpush1.msra.mxu0 %v77
    %209 = vmatprep.subr.mxu0 0.0
    %210 = vmatpush1.msra.mxu0 %v78
    %211 = vmatprep.subr.mxu0 0.0
    %212 = vmatpush1.msra.mxu0 %v79
    %213 = vmatprep.subr.mxu0 0.0
    %214 = vmatpush1.msra.mxu0 %v80
    %215 = vmatprep.subr.mxu0 0.0
    %216 = vmatpush1.msra.mxu0 %v81
    %217 = vmatprep.subr.mxu0 0.0
    %218 = vmatpush1.msra.mxu0 %v82
    %219 = vmatprep.subr.mxu0 0.0
    %220 = vmatpush1.msra.mxu0 %v83
    %221 = vmatprep.subr.mxu0 0.0
    %222 = vmatpush1.msra.mxu0 %v84
    %223 = vmatprep.subr.mxu0 0.0
    %224 = vmatpush1.msra.mxu0 %v85
    %225 = vmatprep.subr.mxu0 0.0
    %226 = vmatpush1.msra.mxu0 %v86
    %227 = vmatprep.subr.mxu0 0.0
    %228 = vmatpush1.msra.mxu0 %v87
    %229 = vmatprep.subr.mxu0 0.0
    %230 = vmatpush1.msra.mxu0 0.0
    %231 = vmatprep.subr.mxu0 0.0
    %232 = vmatpush1.msra.mxu0 0.0
    %233 = vmatprep.subr.mxu0 0.0
    %234 = vmatpush1.msra.mxu0 0.0
    %235 = vmatprep.subr.mxu0 0.0
    %236 = vmatpush1.msra.mxu0 0.0
    %237 = vmatprep.subr.mxu0 0.0
    %238 = vmatpush1.msra.mxu0 0.0
    %239 = vmatprep.subr.mxu0 0.0
    %240 = vmatpush1.msra.mxu0 0.0
    %241 = vmatprep.subr.mxu0 0.0
    %242 = vmatpush1.msra.mxu0 0.0
    %243 = vmatprep.subr.mxu0 0.0
    %244 = vmatpush1.msra.mxu0 0.0
    %245 = vmatprep.subr.mxu0 0.0
    %246 = vmatpush1.msra.mxu0 0.0
    %247 = vmatprep.subr.mxu0 0.0
    %248 = vmatpush1.msra.mxu0 0.0
    %249 = vmatprep.subr.mxu0 0.0
    %250 = vmatpush1.msra.mxu0 0.0
    %251 = vmatprep.subr.mxu0 0.0
    %252 = vmatpush1.msra.mxu0 0.0
    %253 = vmatprep.subr.mxu0 0.0
    %254 = vmatpush1.msra.mxu0 0.0
    %255 = vmatprep.subr.mxu0 0.0
    %256 = vmatpush1.msra.mxu0 0.0
    %257 = vmatprep.subr.mxu0 0.0
    %258 = vmatpush1.msra.mxu0 0.0
    %259 = vmatprep.subr.mxu0 0.0
    %260 = vmatpush1.msra.mxu0 0.0
    %261 = vmatprep.subr.mxu0 0.0
    %262 = vmatpush1.msra.mxu0 0.0
    %263 = vmatprep.subr.mxu0 0.0
    %264 = vmatpush1.msra.mxu0 0.0
    %265 = vmatprep.subr.mxu0 0.0
    %266 = vmatpush1.msra.mxu0 0.0
    %267 = vmatprep.subr.mxu0 0.0
    %268 = vmatpush1.msra.mxu0 0.0
    %269 = vmatprep.mubr.f32.mxu0 0.0
    %270 = vmatmul.mubr.f32.gmra.mrb[0].mxu0 %v200
    %v271 = vpop.f32.mrb[0].mxu0
    %v272 = vadd.f32 0.0, %v271
    %v273 = vpop.f32.mrb[0].mxu0
    %274 = vmatprep.mubr.f32.mxu0 0.0
    %275 = vmatmul.mubr.f32.gmra.mrb[0].mxu0 %v203
    %v276 = vpop.f32.mrb[0].mxu0
    %v277 = vadd.f32 0.0, %v276
    %v278 = vpop.f32.mrb[0].mxu0
    %279 = vdwg.mxu0
    %280 = vmatprep.subr.mxu0 0.0
    %281 = vmatpush1.msra.mxu0 %v88
    %282 = vmatprep.subr.mxu0 0.0
    %283 = vmatpush1.msra.mxu0 %v89
    %284 = vmatprep.subr.mxu0 0.0
    %285 = vmatpush1.msra.mxu0 %v90
    %286 = vmatprep.subr.mxu0 0.0
    %287 = vmatpush1.msra.mxu0 %v91
    %288 = vmatprep.subr.mxu0 0.0
    %289 = vmatpush1.msra.mxu0 %v92
    %290 = vmatprep.subr.mxu0 0.0
    %291 = vmatpush1.msra.mxu0 %v93
    %292 = vmatprep.subr.mxu0 0.0
    %293 = vmatpush1.msra.mxu0 %v94
    %294 = vmatprep.subr.mxu0 0.0
    %295 = vmatpush1.msra.mxu0 %v95
    %296 = vmatprep.subr.mxu0 0.0
    %297 = vmatpush1.msra.mxu0 %v96
    %298 = vmatprep.subr.mxu0 0.0
    %299 = vmatpush1.msra.mxu0 %v97
    %300 = vmatprep.subr.mxu0 0.0
    %301 = vmatpush1.msra.mxu0 %v98
    %302 = vmatprep.subr.mxu0 0.0
    %303 = vmatpush1.msra.mxu0 %v99
    %304 = vmatprep.subr.mxu0 0.0
    %305 = vmatpush1.msra.mxu0 0.0
    %306 = vmatprep.subr.mxu0 0.0
    %307 = vmatpush1.msra.mxu0 0.0
    %308 = vmatprep.subr.mxu0 0.0
    %309 = vmatpush1.msra.mxu0 0.0
    %310 = vmatprep.subr.mxu0 0.0
    %311 = vmatpush1.msra.mxu0 0.0
    %312 = vmatprep.subr.mxu0 0.0
    %313 = vmatpush1.msra.mxu0 0.0
    %314 = vmatprep.subr.mxu0 0.0
    %315 = vmatpush1.msra.mxu0 0.0
    %316 = vmatprep.subr.mxu0 0.0
    %317 = vmatpush1.msra.mxu0 0.0
    %318 = vmatprep.subr.mxu0 0.0
    %319 = vmatpush1.msra.mxu0 0.0
    %320 = vmatprep.subr.mxu0 0.0
    %321 = vmatpush1.msra.mxu0 0.0
    %322 = vmatprep.subr.mxu0 0.0
    %323 = vmatpush1.msra.mxu0 0.0
    %324 = vmatprep.subr.mxu0 0.0
    %325 = vmatpush1.msra.mxu0 0.0
    %326 = vmatprep.subr.mxu0 0.0
    %327 = vmatpush1.msra.mxu0 0.0
    %328 = vmatprep.subr.mxu0 0.0
    %329 = vmatpush1.msra.mxu0 0.0
    %330 = vmatprep.subr.mxu0 0.0
    %331 = vmatpush1.msra.mxu0 0.0
    %332 = vmatprep.subr.mxu0 0.0
    %333 = vmatpush1.msra.mxu0 0.0
    %334 = vmatprep.subr.mxu0 0.0
    %335 = vmatpush1.msra.mxu0 0.0
    %336 = vmatprep.subr.mxu0 0.0
    %337 = vmatpush1.msra.mxu0 0.0
    %338 = vmatprep.subr.mxu0 0.0
    %339 = vmatpush1.msra.mxu0 0.0
    %340 = vmatprep.subr.mxu0 0.0
    %341 = vmatpush1.msra.mxu0 0.0
    %342 = vmatprep.subr.mxu0 0.0
    %343 = vmatpush1.msra.mxu0 0.0
    %344 = vmatprep.mubr.f32.mxu0 0.0
    %345 = vmatmul.mubr.f32.gmra.mrb[0].mxu0 %v200
    %v346 = vpop.f32.mrb[0].mxu0
    %v347 = vadd.f32 0.0, %v346
    %v348 = vpop.f32.mrb[0].mxu0
    %349 = vmatprep.mubr.f32.mxu0 0.0
    %350 = vmatmul.mubr.f32.gmra.mrb[0].mxu0 %v203
    %v351 = vpop.f32.mrb[0].mxu0
    %v352 = vadd.f32 0.0, %v351
    %v353 = vpop.f32.mrb[0].mxu0
    %354 = vdwg.mxu0
    %v355 = vmul.f32 %v272, %v58
    %v356 = vmul.f32 %v277, %v59
    %v357 = vmul.f32 %v272, %v60
    %v358 = vmul.f32 %v277, %v61
    %v359 = vmul.f32 %v272, %v62
    %v360 = vmul.f32 %v277, %v63
    %v361 = vmul.f32 %v272, %v64
    %v362 = vmul.f32 %v277, %v65
    %v363 = vmul.f32 %v272, %v66
    %v364 = vmul.f32 %v277, %v67
    %v365 = vmul.f32 %v272, %v68
    %v366 = vmul.f32 %v277, %v69
    %v367 = vmul.f32 %v272, %v70
    %v368 = vmul.f32 %v277, %v71
    %v369 = vmul.f32 %v272, %v72
    %v370 = vmul.f32 %v277, %v73
    %v371 = vmul.f32 %v347, %v58
    %v372 = vmul.f32 %v352, %v59
    %v373 = vmul.f32 %v347, %v60
    %v374 = vmul.f32 %v352, %v61
    %v375 = vmul.f32 %v347, %v62
    %v376 = vmul.f32 %v352, %v63
    %v377 = vmul.f32 %v347, %v64
    %v378 = vmul.f32 %v352, %v65
    %v379 = vmul.f32 %v347, %v66
    %v380 = vmul.f32 %v352, %v67
    %v381 = vmul.f32 %v347, %v68
    %v382 = vmul.f32 %v352, %v69
    %v383 = vmul.f32 %v347, %v70
    %v384 = vmul.f32 %v352, %v71
    %v385 = vmul.f32 %v347, %v72
    %v386 = vmul.f32 %v352, %v73
    %v387 = vsel %vm116, %v190, 0
    %v389 = vsel %vm116, %v195, 0
    %v392 = vsel %vm116, %v355, 0
    %v395 = vsel %vm116, %v356, 0
    %v398 = vsel %vm116, %v357, 0
    %v401 = vsel %vm116, %v358, 0
    %v404 = vsel %vm116, %v359, 0
    %v407 = vsel %vm116, %v360, 0
    %v410 = vsel %vm116, %v361, 0
    %v413 = vsel %vm116, %v362, 0
    %v416 = vsel %vm116, %v363, 0
    %v419 = vsel %vm116, %v364, 0
    %v422 = vsel %vm116, %v365, 0
    %v425 = vsel %vm116, %v366, 0
    %v428 = vsel %vm116, %v367, 0
    %v431 = vsel %vm116, %v368, 0
    %v434 = vsel %vm116, %v369, 0
    %v437 = vsel %vm116, %v370, 0
    %439 = vmatprep.subr.mxu0 0.0
    %440 = vmatpush1.xpose.msra.mxu0 %v392
    %441 = vmatprep.subr.mxu0 0.0
    %442 = vmatpush1.xpose.msra.mxu0 %v395
    %443 = vmatprep.subr.mxu0 0.0
    %444 = vmatpush1.xpose.msra.mxu0 %v398
    %445 = vmatprep.subr.mxu0 0.0
    %446 = vmatpush1.xpose.msra.mxu0 %v401
    %447 = vmatprep.subr.mxu0 0.0
    %448 = vmatpush1.xpose.msra.mxu0 %v404
    %449 = vmatprep.subr.mxu0 0.0
    %450 = vmatpush1.xpose.msra.mxu0 %v407
    %451 = vmatprep.subr.mxu0 0.0
    %452 = vmatpush1.xpose.msra.mxu0 %v410
    %453 = vmatprep.subr.mxu0 0.0
    %454 = vmatpush1.xpose.msra.mxu0 %v413
    %455 = vmatprep.subr.mxu0 0.0
    %456 = vmatpush1.xpose.msra.mxu0 %v416
    %457 = vmatprep.subr.mxu0 0.0
    %458 = vmatpush1.xpose.msra.mxu0 %v419
    %459 = vmatprep.subr.mxu0 0.0
    %460 = vmatpush1.xpose.msra.mxu0 %v422
    %461 = vmatprep.subr.mxu0 0.0
    %462 = vmatpush1.xpose.msra.mxu0 %v425
    %463 = vmatprep.subr.mxu0 0.0
    %464 = vmatpush1.xpose.msra.mxu0 %v428
    %465 = vmatprep.subr.mxu0 0.0
    %466 = vmatpush1.xpose.msra.mxu0 %v431
    %467 = vmatprep.subr.mxu0 0.0
    %468 = vmatpush1.xpose.msra.mxu0 %v434
    %469 = vmatprep.subr.mxu0 0.0
    %470 = vmatpush1.xpose.msra.mxu0 %v437
    %471 = vmatprep.subr.mxu0 0.0
    %472 = vmatpush1.xpose.msra.mxu0 0.0
    %473 = vmatprep.subr.mxu0 0.0
    %474 = vmatpush1.xpose.msra.mxu0 0.0
    %475 = vmatprep.subr.mxu0 0.0
    %476 = vmatpush1.xpose.msra.mxu0 0.0
    %477 = vmatprep.subr.mxu0 0.0
    %478 = vmatpush1.xpose.msra.mxu0 0.0
    %479 = vmatprep.subr.mxu0 0.0
    %480 = vmatpush1.xpose.msra.mxu0 0.0
    %481 = vmatprep.subr.mxu0 0.0
    %482 = vmatpush1.xpose.msra.mxu0 0.0
    %483 = vmatprep.subr.mxu0 0.0
    %484 = vmatpush1.xpose.msra.mxu0 0.0
    %485 = vmatprep.subr.mxu0 0.0
    %486 = vmatpush1.xpose.msra.mxu0 0.0
    %487 = vmatprep.subr.mxu0 0.0
    %488 = vmatpush1.xpose.msra.mxu0 0.0
    %489 = vmatprep.subr.mxu0 0.0
    %490 = vmatpush1.xpose.msra.mxu0 0.0
    %491 = vmatprep.subr.mxu0 0.0
    %492 = vmatpush1.xpose.msra.mxu0 0.0
    %493 = vmatprep.subr.mxu0 0.0
    %494 = vmatpush1.xpose.msra.mxu0 0.0
    %495 = vmatprep.subr.mxu0 0.0
    %496 = vmatpush1.xpose.msra.mxu0 0.0
    %497 = vmatprep.subr.mxu0 0.0
    %498 = vmatpush1.xpose.msra.mxu0 0.0
    %499 = vmatprep.subr.mxu0 0.0
    %500 = vmatpush1.xpose.msra.mxu0 0.0
    %501 = vmatprep.subr.mxu0 0.0
    %502 = vmatpush1.xpose.msra.mxu0 0.0
    %503 = vmatprep.mubr.f32.mxu0 0.0
    %504 = vmatmul.mubr.f32.gmra.mrb[0].mxu0 %v387
    %v505 = vpop.f32.mrb[0].mxu0
    %v506 = vadd.f32 0.0, %v505
    %v507 = vpop.f32.mrb[0].mxu0
    %508 = vmatprep.mubr.f32.mxu0 0.0
    %509 = vmatmul.mubr.f32.gmra.mrb[0].mxu0 %v389
    %v510 = vpop.f32.mrb[0].mxu0
    %v511 = vadd.f32 0.0, %v510
    %v512 = vpop.f32.mrb[0].mxu0
    %513 = vdwg.mxu0
    %514 = vmax.xlane.f32.xlu0 %v506
    %v515 = vpop.xlane.xlu0 %514
    %516 = vmax.xlane.f32.xlu0 %v511
    %v517 = vpop.xlane.xlu0 %516
    %v518 = vsub.f32 %v506, %v515
    %v519 = vsub.f32 %v511, %v517
    %v520 = vmul.f32 %v518, 1.442695
    %v521 = vpow.pop %v520
    %v522 = vmul.f32 %v519, 1.442695
    %v523 = vpow.pop %v522
    %v524 = vmul.f32 %v521, %v74
    %v525 = vmul.f32 %v523, %v75
    %526 = vmatprep.subr.mxu0 0.0
    %527 = vmatpush1.msra.mxu0 %v42
    %528 = vmatprep.subr.mxu0 0.0
    %529 = vmatpush1.msra.mxu0 %v43
    %530 = vmatprep.subr.mxu0 0.0
    %531 = vmatpush1.msra.mxu0 %v44
    %532 = vmatprep.subr.mxu0 0.0
    %533 = vmatpush1.msra.mxu0 %v45
    %534 = vmatprep.subr.mxu0 0.0
    %535 = vmatpush1.msra.mxu0 %v46
    %536 = vmatprep.subr.mxu0 0.0
    %537 = vmatpush1.msra.mxu0 %v47
    %538 = vmatprep.subr.mxu0 0.0
    %539 = vmatpush1.msra.mxu0 %v48
    %540 = vmatprep.subr.mxu0 0.0
    %541 = vmatpush1.msra.mxu0 %v49
    %542 = vmatprep.subr.mxu0 0.0
    %543 = vmatpush1.msra.mxu0 %v50
    %544 = vmatprep.subr.mxu0 0.0
    %545 = vmatpush1.msra.mxu0 %v51
    %546 = vmatprep.subr.mxu0 0.0
    %547 = vmatpush1.msra.mxu0 %v52
    %548 = vmatprep.subr.mxu0 0.0
    %549 = vmatpush1.msra.mxu0 %v53
    %550 = vmatprep.subr.mxu0 0.0
    %551 = vmatpush1.msra.mxu0 %v54
    %552 = vmatprep.subr.mxu0 0.0
    %553 = vmatpush1.msra.mxu0 %v55
    %554 = vmatprep.subr.mxu0 0.0
    %555 = vmatpush1.msra.mxu0 %v56
    %556 = vmatprep.subr.mxu0 0.0
    %557 = vmatpush1.msra.mxu0 %v57
    %558 = vmatprep.subr.mxu0 0.0
    %559 = vmatpush1.msra.mxu0 0.0
    %560 = vmatprep.subr.mxu0 0.0
    %561 = vmatpush1.msra.mxu0 0.0
    %562 = vmatprep.subr.mxu0 0.0
    %563 = vmatpush1.msra.mxu0 0.0
    %564 = vmatprep.subr.mxu0 0.0
    %565 = vmatpush1.msra.mxu0 0.0
    %566 = vmatprep.subr.mxu0 0.0
    %567 = vmatpush1.msra.mxu0 0.0
    %568 = vmatprep.subr.mxu0 0.0
    %569 = vmatpush1.msra.mxu0 0.0
    %570 = vmatprep.subr.mxu0 0.0
    %571 = vmatpush1.msra.mxu0 0.0
    %572 = vmatprep.subr.mxu0 0.0
    %573 = vmatpush1.msra.mxu0 0.0
    %574 = vmatprep.subr.mxu0 0.0
    %575 = vmatpush1.msra.mxu0 0.0
    %576 = vmatprep.subr.mxu0 0.0
    %577 = vmatpush1.msra.mxu0 0.0
    %578 = vmatprep.subr.mxu0 0.0
    %579 = vmatpush1.msra.mxu0 0.0
    %580 = vmatprep.subr.mxu0 0.0
    %581 = vmatpush1.msra.mxu0 0.0
    %582 = vmatprep.subr.mxu0 0.0
    %583 = vmatpush1.msra.mxu0 0.0
    %584 = vmatprep.subr.mxu0 0.0
    %585 = vmatpush1.msra.mxu0 0.0
    %586 = vmatprep.subr.mxu0 0.0
    %587 = vmatpush1.msra.mxu0 0.0
    %588 = vmatprep.subr.mxu0 0.0
    %589 = vmatpush1.msra.mxu0 0.0
    %590 = vmatprep.mubr.f32.mxu0 0.0
    %591 = vmatmul.mubr.f32.gmra.mrb[0].mxu0 %v524
    %v592 = vpop.f32.mrb[0].mxu0
    %v593 = vadd.f32 0.0, %v592
    %v594 = vpop.f32.mrb[0].mxu0
    %595 = vmatprep.mubr.f32.mxu0 0.0
    %596 = vmatmul.mubr.f32.gmra.mrb[0].mxu0 %v525
    %v597 = vpop.f32.mrb[0].mxu0
    %v598 = vadd.f32 0.0, %v597
    %v599 = vpop.f32.mrb[0].mxu0
    %600 = vdwg.mxu0
    %v601 = vrcp.pop %v593
    %v602 = vrcp.pop %v598
    %v603 = vmul.f32 %v524, %v601
    %v604 = vmul.f32 %v525, %v602
    %605 = vmatprep.subr.mxu0 0.0
    %606 = vmatpush1.msra.mxu0 %v371
    %607 = vmatprep.subr.mxu0 0.0
    %608 = vmatpush1.msra.mxu0 %v372
    %609 = vmatprep.subr.mxu0 0.0
    %610 = vmatpush1.msra.mxu0 %v373
    %611 = vmatprep.subr.mxu0 0.0
    %612 = vmatpush1.msra.mxu0 %v374
    %613 = vmatprep.subr.mxu0 0.0
    %614 = vmatpush1.msra.mxu0 %v375
    %615 = vmatprep.subr.mxu0 0.0
    %616 = vmatpush1.msra.mxu0 %v376
    %617 = vmatprep.subr.mxu0 0.0
    %618 = vmatpush1.msra.mxu0 %v377
    %619 = vmatprep.subr.mxu0 0.0
    %620 = vmatpush1.msra.mxu0 %v378
    %621 = vmatprep.subr.mxu0 0.0
    %622 = vmatpush1.msra.mxu0 %v379
    %623 = vmatprep.subr.mxu0 0.0
    %624 = vmatpush1.msra.mxu0 %v380
    %625 = vmatprep.subr.mxu0 0.0
    %626 = vmatpush1.msra.mxu0 %v381
    %627 = vmatprep.subr.mxu0 0.0
    %628 = vmatpush1.msra.mxu0 %v382
    %629 = vmatprep.subr.mxu0 0.0
    %630 = vmatpush1.msra.mxu0 %v383
    %631 = vmatprep.subr.mxu0 0.0
    %632 = vmatpush1.msra.mxu0 %v384
    %633 = vmatprep.subr.mxu0 0.0
    %634 = vmatpush1.msra.mxu0 %v385
    %635 = vmatprep.subr.mxu0 0.0
    %636 = vmatpush1.msra.mxu0 %v386
    %637 = vmatprep.subr.mxu0 0.0
    %638 = vmatpush1.msra.mxu0 0.0
    %639 = vmatprep.subr.mxu0 0.0
    %640 = vmatpush1.msra.mxu0 0.0
    %641 = vmatprep.subr.mxu0 0.0
    %642 = vmatpush1.msra.mxu0 0.0
    %643 = vmatprep.subr.mxu0 0.0
    %644 = vmatpush1.msra.mxu0 0.0
    %645 = vmatprep.subr.mxu0 0.0
    %646 = vmatpush1.msra.mxu0 0.0
    %647 = vmatprep.subr.mxu0 0.0
    %648 = vmatpush1.msra.mxu0 0.0
    %649 = vmatprep.subr.mxu0 0.0
    %650 = vmatpush1.msra.mxu0 0.0
    %651 = vmatprep.subr.mxu0 0.0
    %652 = vmatpush1.msra.mxu0 0.0
    %653 = vmatprep.subr.mxu0 0.0
    %654 = vmatpush1.msra.mxu0 0.0
    %655 = vmatprep.subr.mxu0 0.0
    %656 = vmatpush1.msra.mxu0 0.0
    %657 = vmatprep.subr.mxu0 0.0
    %658 = vmatpush1.msra.mxu0 0.0
    %659 = vmatprep.subr.mxu0 0.0
    %660 = vmatpush1.msra.mxu0 0.0
    %661 = vmatprep.subr.mxu0 0.0
    %662 = vmatpush1.msra.mxu0 0.0
    %663 = vmatprep.subr.mxu0 0.0
    %664 = vmatpush1.msra.mxu0 0.0
    %665 = vmatprep.subr.mxu0 0.0
    %666 = vmatpush1.msra.mxu0 0.0
    %667 = vmatprep.subr.mxu0 0.0
    %668 = vmatpush1.msra.mxu0 0.0
    %669 = vmatprep.mubr.f32.mxu0 0.0
    %670 = vmatmul.mubr.f32.gmra.mrb[0].mxu0 %v603
    %v671 = vpop.f32.mrb[0].mxu0
    %v672 = vadd.f32 0.0, %v671
    %v673 = vpop.f32.mrb[0].mxu0
    %674 = vmatprep.mubr.f32.mxu0 0.0
    %675 = vmatmul.mubr.f32.gmra.mrb[0].mxu0 %v604
    %v676 = vpop.f32.mrb[0].mxu0
    %v677 = vadd.f32 0.0, %v676
    %v678 = vpop.f32.mrb[0].mxu0
    %679 = vdwg.mxu0
    %v680 = vlaneseq
    %v681 = vshrl.u32 %v680, 7
    %v682 = vsub.s32 0, %v681
    %v683 = vrot.slane %v109, %v682
    %v685 = vsel %vm116, %v672, 0
    %v688 = vsel %vm116, %v677, 0
    %690 = vmatprep.subr.mxu0 0.0
    %691 = vmatpush1.msra.mxu0 %v104
    %692 = vmatprep.subr.mxu0 0.0
    %693 = vmatpush1.msra.mxu0 %v105
    %694 = vmatprep.subr.mxu0 0.0
    %695 = vmatpush1.msra.mxu0 %v106
    %696 = vmatprep.subr.mxu0 0.0
    %697 = vmatpush1.msra.mxu0 %v107
    %698 = vmatprep.subr.mxu0 0.0
    %699 = vmatpush1.msra.mxu0 0.0
    %700 = vmatprep.subr.mxu0 0.0
    %701 = vmatpush1.msra.mxu0 0.0
    %702 = vmatprep.subr.mxu0 0.0
    %703 = vmatpush1.msra.mxu0 0.0
    %704 = vmatprep.subr.mxu0 0.0
    %705 = vmatpush1.msra.mxu0 0.0
    %706 = vmatprep.subr.mxu0 0.0
    %707 = vmatpush1.msra.mxu0 0.0
    %708 = vmatprep.subr.mxu0 0.0
    %709 = vmatpush1.msra.mxu0 0.0
    %710 = vmatprep.subr.mxu0 0.0
    %711 = vmatpush1.msra.mxu0 0.0
    %712 = vmatprep.subr.mxu0 0.0
    %713 = vmatpush1.msra.mxu0 0.0
    %714 = vmatprep.subr.mxu0 0.0
    %715 = vmatpush1.msra.mxu0 0.0
    %716 = vmatprep.subr.mxu0 0.0
    %717 = vmatpush1.msra.mxu0 0.0
    %718 = vmatprep.subr.mxu0 0.0
    %719 = vmatpush1.msra.mxu0 0.0
    %720 = vmatprep.subr.mxu0 0.0
    %721 = vmatpush1.msra.mxu0 0.0
    %722 = vmatprep.subr.mxu0 0.0
    %723 = vmatpush1.msra.mxu0 0.0
    %724 = vmatprep.subr.mxu0 0.0
    %725 = vmatpush1.msra.mxu0 0.0
    %726 = vmatprep.subr.mxu0 0.0
    %727 = vmatpush1.msra.mxu0 0.0
    %728 = vmatprep.subr.mxu0 0.0
    %729 = vmatpush1.msra.mxu0 0.0
    %730 = vmatprep.subr.mxu0 0.0
    %731 = vmatpush1.msra.mxu0 0.0
    %732 = vmatprep.subr.mxu0 0.0
    %733 = vmatpush1.msra.mxu0 0.0
    %734 = vmatprep.subr.mxu0 0.0
    %735 = vmatpush1.msra.mxu0 0.0
    %736 = vmatprep.subr.mxu0 0.0
    %737 = vmatpush1.msra.mxu0 0.0
    %738 = vmatprep.subr.mxu0 0.0
    %739 = vmatpush1.msra.mxu0 0.0
    %740 = vmatprep.subr.mxu0 0.0
    %741 = vmatpush1.msra.mxu0 0.0
    %742 = vmatprep.subr.mxu0 0.0
    %743 = vmatpush1.msra.mxu0 0.0
    %744 = vmatprep.subr.mxu0 0.0
    %745 = vmatpush1.msra.mxu0 0.0
    %746 = vmatprep.subr.mxu0 0.0
    %747 = vmatpush1.msra.mxu0 0.0
    %748 = vmatprep.subr.mxu0 0.0
    %749 = vmatpush1.msra.mxu0 0.0
    %750 = vmatprep.subr.mxu0 0.0
    %751 = vmatpush1.msra.mxu0 0.0
    %752 = vmatprep.subr.mxu0 0.0
    %753 = vmatpush1.msra.mxu0 0.0
    %754 = vmatprep.mubr.f32.mxu0 0.0
    %755 = vmatmul.mubr.f32.gmra.mrb[0].mxu0 %v685
    %v756 = vpop.f32.mrb[0].mxu0
    %v757 = vadd.f32 %v683, %v756
    %v758 = vpop.f32.mrb[0].mxu0
    %759 = vmatprep.mubr.f32.mxu0 0.0
    %760 = vmatmul.mubr.f32.gmra.mrb[0].mxu0 %v688
    %v761 = vpop.f32.mrb[0].mxu0
    %v762 = vadd.f32 %v683, %v761
    %v763 = vpop.f32.mrb[0].mxu0
    %764 = vdwg.mxu0
    %v765 = vadd.f32 %v757, %v40
    %v766 = vadd.f32 %v762, %v41
    %v767 = vsel %vm116, %v765, 0.0
    %768 = vadd.xlane.f32.xlu0 %v767
    %v769 = vpop.xlane.xlu0 %768
    %v770 = vsel %vm116, %v766, 0.0
    %771 = vadd.xlane.f32.xlu0 %v770
    %v772 = vpop.xlane.xlu0 %771
    %v773 = vrcp.pop 32.0
    %v774 = vmul.f32 %v769, %v773
    %v775 = vmul.f32 %v772, %v773
    %v776 = vsub.f32 %v765, %v774
    %v777 = vsub.f32 %v766, %v775
    %v778 = vmul.f32 %v776, %v776
    %v779 = vmul.f32 %v777, %v777
    %v780 = vsel %vm116, %v778, 0.0
    %781 = vadd.xlane.f32.xlu0 %v780
    %v782 = vpop.xlane.xlu0 %781
    %v783 = vsel %vm116, %v779, 0.0
    %784 = vadd.xlane.f32.xlu0 %v783
    %v785 = vpop.xlane.xlu0 %784
    %v786 = vmul.f32 %v782, %v773
    %v787 = vmul.f32 %v785, %v773
    %v788 = vadd.f32 %v786, 1e-05
    %v789 = vadd.f32 %v787, 1e-05
    %v790 = vrsqrt.pop %v788
    %v791 = vrsqrt.pop %v789
    %v792 = vmul.f32 %v776, %v790
    %v793 = vmul.f32 %v777, %v791
    %v794 = vlaneseq
    %v795 = vshrl.u32 %v794, 7
    %v796 = vsub.s32 0, %v795
    %v797 = vrot.slane %v110, %v796
    %v798 = vmul.f32 %v792, %v797
    %v799 = vmul.f32 %v793, %v797
    %v800 = vlaneseq
    %v801 = vshrl.u32 %v800, 7
    %v802 = vsub.s32 0, %v801
    %v803 = vrot.slane %v111, %v802
    %v804 = vadd.f32 %v798, %v803
    %v805 = vadd.f32 %v799, %v803
    %806 = vst.msk [vmem:[#allocation7] sm:$0xff] %vm116, %v804
    %807 = vst.msk [vmem:[#allocation7 + $0x8] sm:$0xff] %vm116, %v805
    // Predicated region
    $region18: #{tpu_custom_call.1} parent=1 // pred_check
      _
    $region19: #{tpu_custom_call.1} parent=1 // pred_check_branch
      %809 = sbr.rel (0) target = $region21
    $region20: #{tpu_custom_call.1} parent=1 // pred_region
      %s811 = ssub.s32 256, 256
      %812 = vsyncadd [#allocation4], %s811
      %s813 = sshll.u32 [#allocation7], 4
      %s814 = int_to_ptr.vmem [resolvable:$true] %s813
      %819 = dma.vmem_to_hbm [thread:$0]  %s814, 256, %s2, [#allocation4], 128, 128, 8
    $region21: #{tpu_custom_call.1} parent=1 // pred_fallthru
      _
    // Predicated region
    $region22: #{tpu_custom_call.1} parent=1 // pred_check
      _
    $region23: #{tpu_custom_call.1} parent=1 // pred_check_branch
      %821 = sbr.rel (0) target = $region25
    $region24: #{tpu_custom_call.1} parent=1 // pred_region
      %822 = dma.done [#allocation4], 256
    $region25: #{tpu_custom_call.1} parent=1 // pred_fallthru
      _
    %823 = vsyncpa [#allocation3], 1
    %824 = vsyncpa [#allocation6], 1
    %825 = vsyncpa [#allocation4], 1

</llo_original>
